<compile_context>
chip_gen: v5e
topology: v5e:2x2
jax: 0.10.0
libtpu: 0.0.40
codegen_flags: <defaults>
</compile_context>

<pallas_src>
import functools

import jax
import jax.numpy as jnp
from jax.experimental import pallas as pl
from jax.experimental.pallas import tpu as pltpu


def _round_up(x, m):
    return (x + m - 1) // m * m


# ----------------------------------------------------------------------------
# Fused 3-layer GCN kernel
#   grid = (num_layers, num_row_tiles)   -- layer axis outermost (sequential)
#   a_ref : (TM, N_pad)      bf16   row panel of normalized adjacency
#   x_ref : (N_pad, F_pad)   f32    padded input features (resident, used at l=0)
#   w_ref : (1, F_pad, F_pad) f32   padded weight of layer l
#   b_ref : (1, 1, F_pad)    f32    padded bias of layer l
#   o_ref : (TM, F_pad)      f32    output row panel (last layer's write wins)
#   h_ref : (N_pad, F_pad)   f32    VMEM scratch: activations of previous layer
#   xw_ref: (N_pad, F_pad)   bf16   VMEM scratch: X @ W_l, computed once per layer
# ----------------------------------------------------------------------------
def fused_gcn_kernel(a_ref, x_ref, w_ref, b_ref, o_ref, h_ref, xw_ref, *,
                     num_layers):
    l = pl.program_id(0)          # layer index   (outer, sequential dependency)
    i = pl.program_id(1)          # row-tile index
    tm = o_ref.shape[0]

    w = w_ref[0]                  # (F_pad, F_pad) f32
    b = b_ref[0]                  # (1, F_pad)     f32

    # --- once per layer: feature transform X @ W_l, cached resident in VMEM ---
    @pl.when(i == 0)
    def _():
        @pl.when(l == 0)
        def _():
            xw_ref[...] = jnp.dot(
                x_ref[...], w, preferred_element_type=jnp.float32
            ).astype(xw_ref.dtype)

        @pl.when(l > 0)
        def _():
            xw_ref[...] = jnp.dot(
                h_ref[...], w, preferred_element_type=jnp.float32
            ).astype(xw_ref.dtype)

    # --- per row tile: aggregation A_panel @ (XW) on the MXU (bf16 in, f32 acc) ---
    agg = jnp.dot(a_ref[...], xw_ref[...], preferred_element_type=jnp.float32)
    out = agg + b                                        # f32 epilogue
    out = jnp.where(l < num_layers - 1, jnp.maximum(out, 0.0), out)  # ReLU on 1,2

    # Stash this layer's rows for the next layer (xw for layer l was snapshotted
    # at i==0 before any overwrite, so this never corrupts the current layer).
    @pl.when(l < num_layers - 1)
    def _():
        row0 = pl.multiple_of(i * tm, tm)
        h_ref[pl.ds(row0, tm), :] = out

    # Write the output panel every visit; the final (last-layer) writeback wins.
    o_ref[...] = out.astype(o_ref.dtype)


# ----------------------------------------------------------------------------
# Glue (plain JAX): dense normalized adjacency from edge_index (PyG gcn_norm)
# ----------------------------------------------------------------------------
def build_normalized_adjacency(edge_index, num_nodes):
    src = edge_index[0]
    dst = edge_index[1]
    a = jnp.zeros((num_nodes, num_nodes), jnp.float32)
    a = a.at[dst, src].add(1.0)                       # A[t, s] += 1 per edge s->t
    a = a + jnp.eye(num_nodes, dtype=jnp.float32)     # self-loops
    deg = jnp.sum(a, axis=1)
    dinv = jnp.where(deg > 0.0, 1.0 / jnp.sqrt(deg), 0.0)
    return dinv[:, None] * a * dinv[None, :]          # D^-1/2 (A+I) D^-1/2


# ----------------------------------------------------------------------------
# Full GCN forward (eval mode) — single fused pallas_call
# ----------------------------------------------------------------------------
def gcn_forward(x, edge_index, params, *, agg_dtype=jnp.bfloat16):
    n, input_dim = x.shape
    (w1, b1), (w2, b2), (w3, b3) = params
    hidden_dim = w1.shape[1]
    output_dim = w3.shape[1]
    num_layers = 3

    a_hat = build_normalized_adjacency(edge_index, n)

    # --- lane-dense padding ---------------------------------------------------
    f_pad = _round_up(max(input_dim, hidden_dim, output_dim, 128), 128)
    n_pad = _round_up(max(n, 128), 128)
    tm = 128
    for cand in (512, 256, 128):                  # largest row tile dividing n_pad
        if n_pad % cand == 0:
            tm = cand
            break
    nt = n_pad // tm

    a_pad = (jnp.zeros((n_pad, n_pad), jnp.float32)
             .at[:n, :n].set(a_hat).astype(agg_dtype))
    x_pad = jnp.zeros((n_pad, f_pad), jnp.float32).at[:n, :input_dim].set(x)

    def pad_w(w):
        return jnp.zeros((f_pad, f_pad), jnp.float32).at[:w.shape[0], :w.shape[1]].set(w)

    def pad_b(b):
        return jnp.zeros((f_pad,), jnp.float32).at[:b.shape[0]].set(b)

    w_stack = jnp.stack([pad_w(w1), pad_w(w2), pad_w(w3)])           # (3, F, F)
    b_stack = jnp.stack([pad_b(b1), pad_b(b2), pad_b(b3)])[:, None]  # (3, 1, F)

    # --- VMEM budget + cost estimate -------------------------------------------
    a_item = jnp.dtype(agg_dtype).itemsize
    vmem_bytes = (
        2 * tm * n_pad * a_item          # A panels (double-buffered)
        + 2 * n_pad * f_pad * 4          # X (resident)
        + 2 * f_pad * f_pad * 4          # W_l
        + 2 * f_pad * 4                  # b_l
        + 2 * tm * f_pad * 4             # output panel
        + n_pad * f_pad * 4              # h scratch
        + n_pad * f_pad * a_item         # XW scratch
    )
    # >= every chip's default scoped limit, <= 48 MiB so it fits v7x's 64 MiB VMEM.
    vmem_limit = min(max(int(vmem_bytes * 1.5) + (1 << 20), 32 * 1024 * 1024),
                     48 * 1024 * 1024)

    flops = num_layers * (2 * n_pad * f_pad * f_pad + 2 * n_pad * n_pad * f_pad)
    bytes_accessed = (a_pad.size * a_item + x_pad.size * 4 + w_stack.size * 4
                      + b_stack.size * 4 + n_pad * f_pad * 4)
    cost = pl.CostEstimate(flops=flops, transcendentals=0,
                           bytes_accessed=bytes_accessed)

    grid_spec = pltpu.PrefetchScalarGridSpec(
        num_scalar_prefetch=0,
        grid=(num_layers, nt),
        in_specs=[
            pl.BlockSpec((tm, n_pad), lambda l, i: (i, 0)),           # A_hat panel
            pl.BlockSpec((n_pad, f_pad), lambda l, i: (0, 0)),        # X (resident)
            pl.BlockSpec((1, f_pad, f_pad), lambda l, i: (l, 0, 0)),  # W_l
            pl.BlockSpec((1, 1, f_pad), lambda l, i: (l, 0, 0)),      # b_l
        ],
        out_specs=pl.BlockSpec((tm, f_pad), lambda l, i: (i, 0)),
        scratch_shapes=[
            pltpu.VMEM((n_pad, f_pad), jnp.float32),   # h  (layer activations)
            pltpu.VMEM((n_pad, f_pad), agg_dtype),     # XW (bf16 for aggregation)
        ],
    )

    out_pad = pl.pallas_call(
        functools.partial(fused_gcn_kernel, num_layers=num_layers),
        out_shape=jax.ShapeDtypeStruct((n_pad, f_pad), jnp.float32),
        grid_spec=grid_spec,
        compiler_params=pltpu.CompilerParams(
            # Layer axis is a true sequential dependency; the row axis reads the
            # full resident h scratch of the previous layer, so it must stay
            # "arbitrary" as well in this fused formulation.
            dimension_semantics=("arbitrary", "arbitrary"),
            vmem_limit_bytes=vmem_limit,
        ),
        cost_estimate=cost,
    )(a_pad, x_pad, w_stack, b_stack)

    return out_pad[:n, :output_dim]


# ----------------------------------------------------------------------------
# Pure-JAX reference (for a loose numerical sanity check)
# ----------------------------------------------------------------------------
def gcn_reference(x, edge_index, params):
    a = build_normalized_adjacency(edge_index, x.shape[0])
    (w1, b1), (w2, b2), (w3, b3) = params
    h = jnp.maximum(a @ (x @ w1) + b1, 0.0)
    h = jnp.maximum(a @ (h @ w2) + b2, 0.0)
    return a @ (h @ w3) + b3


def init_gcn_params(key, input_dim, hidden_dim, output_dim):
    """Deterministic glorot-style weights, zero biases (PyG GCNConv defaults)."""
    def glorot(k, fan_in, fan_out):
        scale = jnp.sqrt(6.0 / (fan_in + fan_out))
        return jax.random.uniform(k, (fan_in, fan_out), jnp.float32, -scale, scale)

    k1, k2, k3 = jax.random.split(key, 3)
    return (
        (glorot(k1, input_dim, hidden_dim), jnp.zeros((hidden_dim,), jnp.float32)),
        (glorot(k2, hidden_dim, hidden_dim), jnp.zeros((hidden_dim,), jnp.float32)),
        (glorot(k3, hidden_dim, output_dim), jnp.zeros((output_dim,), jnp.float32)),
    )


if __name__ == "__main__":
    key = jax.random.PRNGKey(0)
    k_x, k_e, k_p = jax.random.split(key, 3)

    num_nodes = 16
    num_edges = 40
    input_dim, hidden_dim, output_dim = 8, 32, 4

    x = jax.random.normal(k_x, (num_nodes, input_dim), jnp.float32)
    edge_index = jax.random.randint(
        k_e, (2, num_edges), 0, num_nodes, dtype=jnp.int32
    )
    params = init_gcn_params(k_p, input_dim, hidden_dim, output_dim)

    gcn = jax.jit(gcn_forward)
    out = gcn(x, edge_index, params)
    jax.block_until_ready(out)
    assert out.shape == (num_nodes, output_dim)

    ref = gcn_reference(x, edge_index, params)
    assert jnp.allclose(out, ref, rtol=5e-2, atol=5e-2), "mismatch vs reference"

    print("KERNEL_OK")
</pallas_src>

<mosaic_0001>
module attributes {stable_mosaic.version = 11 : i64} {
  func.func @fused_gcn_kernel(%arg0: i32, %arg1: i32, %arg2: memref<128x128xbf16, #tpu.memory_space<vmem>>, %arg3: memref<128x128xf32, #tpu.memory_space<vmem>>, %arg4: memref<1x128x128xf32, #tpu.memory_space<vmem>>, %arg5: memref<1x1x128xf32, #tpu.memory_space<vmem>>, %arg6: memref<128x128xf32, #tpu.memory_space<vmem>>, %arg7: memref<128x128xf32, #tpu.memory_space<vmem>>, %arg8: memref<128x128xbf16, #tpu.memory_space<vmem>>) attributes {dimension_semantics = [#tpu.dimension_semantics<arbitrary>, #tpu.dimension_semantics<arbitrary>], iteration_bounds = array<i64: 3, 1>, scalar_prefetch = 0 : i64, scratch_operands = 2 : i64, tpu.core_type = #tpu.core_type<tc>, window_params = [{transform_indices = @transform_0, window_bounds = array<i64: 128, 128>}, {pipeline_mode = #tpu.pipeline_mode<synchronous>, transform_indices = @transform_1, window_bounds = array<i64: 128, 128>}, {transform_indices = @transform_2, window_bounds = array<i64: 1, 128, 128>}, {transform_indices = @transform_3, window_bounds = array<i64: 1, 1, 128>}, {transform_indices = @transform_4, window_bounds = array<i64: 128, 128>}]} {
    %c0 = arith.constant 0 : index
    %c0_0 = arith.constant 0 : index
    %c0_1 = arith.constant 0 : index
    %0 = vector.load %arg4[%c0, %c0_0, %c0_1] : memref<1x128x128xf32, #tpu.memory_space<vmem>>, vector<1x128x128xf32>
    %1 = vector.shape_cast %0 : vector<1x128x128xf32> to vector<128x128xf32>
    %c0_2 = arith.constant 0 : index
    %c0_3 = arith.constant 0 : index
    %c0_4 = arith.constant 0 : index
    %2 = vector.load %arg5[%c0_2, %c0_3, %c0_4] : memref<1x1x128xf32, #tpu.memory_space<vmem>>, vector<1x1x128xf32>
    %3 = vector.shape_cast %2 : vector<1x1x128xf32> to vector<1x128xf32>
    %c0_i32 = arith.constant 0 : i32
    %4 = arith.cmpi eq, %arg1, %c0_i32 : i32
    %5 = arith.extui %4 : i1 to i32
    %c0_i32_5 = arith.constant 0 : i32
    %6 = arith.cmpi ne, %5, %c0_i32_5 : i32
    scf.if %6 {
      %c0_i32_15 = arith.constant 0 : i32
      %20 = arith.cmpi eq, %arg0, %c0_i32_15 : i32
      %21 = arith.extui %20 : i1 to i32
      %c0_i32_16 = arith.constant 0 : i32
      %22 = arith.cmpi ne, %21, %c0_i32_16 : i32
      scf.if %22 {
        %c0_19 = arith.constant 0 : index
        %c0_20 = arith.constant 0 : index
        %26 = vector.load %arg3[%c0_19, %c0_20] : memref<128x128xf32, #tpu.memory_space<vmem>>, vector<128x128xf32>
        %cst_21 = arith.constant dense<0.000000e+00> : vector<128x128xf32>
        %27 = tpu.matmul %26, %1, %cst_21 {dimension_numbers = #tpu.dot_dimension_numbers<[1], [0], [0], [1], [0, 0, 1, 1], [], []>} : vector<128x128xf32>, vector<128x128xf32>, vector<128x128xf32> -> vector<128x128xf32>
        %28 = arith.truncf %27 : vector<128x128xf32> to vector<128x128xbf16>
        %c0_22 = arith.constant 0 : index
        %c0_23 = arith.constant 0 : index
        %29 = vector.load %arg8[%c0_22, %c0_23] : memref<128x128xbf16, #tpu.memory_space<vmem>>, vector<128x128xbf16>
        tpu.vector_store %arg8[%c0_22, %c0_23], %28 {strides = array<i32>} : memref<128x128xbf16, #tpu.memory_space<vmem>>, vector<128x128xbf16>,
      } else {
      }
      %c0_i32_17 = arith.constant 0 : i32
      %23 = arith.cmpi sgt, %arg0, %c0_i32_17 : i32
      %24 = arith.extui %23 : i1 to i32
      %c0_i32_18 = arith.constant 0 : i32
      %25 = arith.cmpi ne, %24, %c0_i32_18 : i32
      scf.if %25 {
        %c0_19 = arith.constant 0 : index
        %c0_20 = arith.constant 0 : index
        %26 = vector.load %arg7[%c0_19, %c0_20] : memref<128x128xf32, #tpu.memory_space<vmem>>, vector<128x128xf32>
        %cst_21 = arith.constant dense<0.000000e+00> : vector<128x128xf32>
        %27 = tpu.matmul %26, %1, %cst_21 {dimension_numbers = #tpu.dot_dimension_numbers<[1], [0], [0], [1], [0, 0, 1, 1], [], []>} : vector<128x128xf32>, vector<128x128xf32>, vector<128x128xf32> -> vector<128x128xf32>
        %28 = arith.truncf %27 : vector<128x128xf32> to vector<128x128xbf16>
        %c0_22 = arith.constant 0 : index
        %c0_23 = arith.constant 0 : index
        %29 = vector.load %arg8[%c0_22, %c0_23] : memref<128x128xbf16, #tpu.memory_space<vmem>>, vector<128x128xbf16>
        tpu.vector_store %arg8[%c0_22, %c0_23], %28 {strides = array<i32>} : memref<128x128xbf16, #tpu.memory_space<vmem>>, vector<128x128xbf16>,
      } else {
      }
    } else {
    }
    %c0_6 = arith.constant 0 : index
    %c0_7 = arith.constant 0 : index
    %7 = vector.load %arg2[%c0_6, %c0_7] : memref<128x128xbf16, #tpu.memory_space<vmem>>, vector<128x128xbf16>
    %c0_8 = arith.constant 0 : index
    %c0_9 = arith.constant 0 : index
    %8 = vector.load %arg8[%c0_8, %c0_9] : memref<128x128xbf16, #tpu.memory_space<vmem>>, vector<128x128xbf16>
    %cst = arith.constant dense<0.000000e+00> : vector<128x128xf32>
    %9 = tpu.matmul %7, %8, %cst {dimension_numbers = #tpu.dot_dimension_numbers<[1], [0], [0], [1], [0, 0, 1, 1], [], []>} : vector<128x128xbf16>, vector<128x128xbf16>, vector<128x128xf32> -> vector<128x128xf32>
    %10 = vector.broadcast %3 : vector<1x128xf32> to vector<128x128xf32>
    %11 = arith.addf %9, %10 : vector<128x128xf32>
    %c2_i32 = arith.constant 2 : i32
    %12 = arith.cmpi slt, %arg0, %c2_i32 : i32
    %cst_10 = arith.constant 0.000000e+00 : f32
    %13 = vector.broadcast %cst_10 : f32 to vector<128x128xf32>
    %14 = arith.maximumf %11, %13 : vector<128x128xf32>
    %15 = arith.select %12, %14, %11 : vector<128x128xf32>
    %c2_i32_11 = arith.constant 2 : i32
    %16 = arith.cmpi slt, %arg0, %c2_i32_11 : i32
    %17 = arith.extui %16 : i1 to i32
    %c0_i32_12 = arith.constant 0 : i32
    %18 = arith.cmpi ne, %17, %c0_i32_12 : i32
    scf.if %18 {
      %c128_i32 = arith.constant 128 : i32
      %20 = arith.muli %arg1, %c128_i32 : i32
      %21 = tpu.assume_multiple %20, 128 : i32
      %22 = arith.index_cast %21 : i32 to index
      %c0_15 = arith.constant 0 : index
      %23 = vector.load %arg7[%22, %c0_15] : memref<128x128xf32, #tpu.memory_space<vmem>>, vector<128x128xf32>
      tpu.vector_store %arg7[%22, %c0_15], %15 {strides = array<i32>} : memref<128x128xf32, #tpu.memory_space<vmem>>, vector<128x128xf32>,
    } else {
    }
    %c0_13 = arith.constant 0 : index
    %c0_14 = arith.constant 0 : index
    %19 = vector.load %arg6[%c0_13, %c0_14] : memref<128x128xf32, #tpu.memory_space<vmem>>, vector<128x128xf32>
    tpu.vector_store %arg6[%c0_13, %c0_14], %15 {strides = array<i32>} : memref<128x128xf32, #tpu.memory_space<vmem>>, vector<128x128xf32>,
    return
  }
  func.func @transform_0(%arg0: i32, %arg1: i32) -> (i32, i32) {
    %c0_i32 = arith.constant 0 : i32
    %c0_i32_0 = arith.constant 0 : i32
    return %arg1, %c0_i32 : i32, i32
  }
  func.func @transform_1(%arg0: i32, %arg1: i32) -> (i32, i32) {
    %c0_i32 = arith.constant 0 : i32
    %c0_i32_0 = arith.constant 0 : i32
    %c0_i32_1 = arith.constant 0 : i32
    return %c0_i32, %c0_i32_0 : i32, i32
  }
  func.func @transform_2(%arg0: i32, %arg1: i32) -> (i32, i32, i32) {
    %c0_i32 = arith.constant 0 : i32
    %c0_i32_0 = arith.constant 0 : i32
    %c0_i32_1 = arith.constant 0 : i32
    return %arg0, %c0_i32, %c0_i32_0 : i32, i32, i32
  }
  func.func @transform_3(%arg0: i32, %arg1: i32) -> (i32, i32, i32) {
    %c0_i32 = arith.constant 0 : i32
    %c0_i32_0 = arith.constant 0 : i32
    %c0_i32_1 = arith.constant 0 : i32
    return %arg0, %c0_i32, %c0_i32_0 : i32, i32, i32
  }
  func.func @transform_4(%arg0: i32, %arg1: i32) -> (i32, i32) {
    %c0_i32 = arith.constant 0 : i32
    %c0_i32_0 = arith.constant 0 : i32
    return %arg1, %c0_i32 : i32, i32
  }
}

</mosaic_0001>

<llo_original>
// kernel: gcn_forward.1
$region0: #{gcn_forward.1}
  #allocation0 [shape = 'u32[]', space=smem, size = 0x4, offset = 0x4, fixed_abs, tag = 'smem constant byte address 0x4 - core index']
  #allocation1 [shape = 'u32[72,128]{1,0:T(1,128)}', space=vmem, size = 0x9000, scoped, tag = 'internal scratch']
  #allocation2 [shape = 'f32[128,128]{1,0:T(8,128)}', space=vmem, size = 0x10000, scoped, tag = 'scratch operand']
  #allocation3 [shape = 'bf16[128,128]{1,0:T(8,128)(2,1)}', space=vmem, size = 0x8000, scoped, tag = 'scratch operand']
  %s0 = inlined_call_operand.vmem [shape: bf16[128,128], index: 0, kind: input, shape index: {}]
  %s1 = inlined_call_operand.vmem [shape: f32[128,128], index: 1, kind: input, shape index: {}]
  %s2 = inlined_call_operand.vmem [shape: f32[3,128,128], index: 2, kind: input, shape index: {}]
  %s3 = inlined_call_operand.vmem [shape: f32[3,1,128], index: 3, kind: input, shape index: {}]
  %s4 = inlined_call_operand.vmem [shape: f32[128,128], index: 4, kind: output, shape index: {}]
  %s5 = sld [smem:[#allocation0]]
  $region65: #{gcn_forward.1} parent=0
    _
  %s7 = ssub.s32 1, %s5
  %s8 = scalar_select 0, %s7, %s5
  loop: start=0, step=1, limit=5
  $region2: #{gcn_forward.1} parent=0 // loop_pre_header
    _
  $region3: #{gcn_forward.1} parent=0 // loop_header
    %s10 = sphi 0, %s14
    %p11 = scmp.ge.s32.totalorder %s10, 5
    %s17 = sphi 0, %s29
    %s18 = sphi 0, %s25
    %s19 = sphi 0, %s17
    %s20 = sphi 0, %s18
    %s21 = sphi 0, %s19
    %s22 = sphi 0, %s20
    %s32 = sphi 0, %s34
    %s35 = sphi 0, %s32
    %s36 = sphi 0, %s35
    %s52 = sphi 0, %s36
    %s56 = sphi 0, %s56
    %s58 = sphi 0, %s56
    %s59 = sphi 0, %s58
    %s73 = sphi 0, %s59
    %s79 = sphi 0, %s81
    %s82 = sphi 0, %s79
    %s83 = sphi 0, %s82
    %s99 = sphi 0, %s83
    %s105 = sphi 0, %s107
    %s108 = sphi 0, %s105
    %s109 = sphi 0, %s108
    %s125 = sphi 0, %s109
    %s131 = sphi 0, %s133
    %s134 = sphi 0, %s131
    %s135 = sphi 0, %s134
    %s151 = sphi 0, %s135
  $region4: #{gcn_forward.1} parent=0 // loop_header_branch
    %13 = sbr.rel (%p11) target = $region8
  $region5: #{gcn_forward.1} parent=0 // loop_body
    %s15 = ssub.s32 %s10, 1
    %s16 = ssub.s32 %s10, 2
    %s23 = sadd.s32 1, %s18
    %p24 = scmp.ge.s32.totalorder %s23, 1
    %s25 = scalar_select %p24, 0, %s23
    %s26 = sadd.s32 1, %s17
    %s27 = scalar_select %p24, %s26, %s17
    %p28 = scmp.ge.s32.totalorder %s27, 3
    %s29 = scalar_select %p28, 0, %s27
    %s30 = ssub.s32 %s18, %s25
    %p31 = scmp.eq.s32.totalorder %s30, 0
    %s33 = sadd.s32 %s32, 1
    %s34 = scalar_select %p31, %s32, %s33
    %p37 = pneg %p31
    %p38 = scmp.eq.s32.totalorder %s10, 2
    %p39 = por %p37, %p38
    %p40 = scmp.ne.s32.totalorder %s32, %s35
    %p41 = scmp.eq.s32.totalorder %s10, 0
    %p42 = por %p40, %p41
    %p43 = scmp.ne.s32.totalorder %s32, %s35
    %p44 = scmp.eq.s32.totalorder %s15, 2
    %p45 = por %p43, %p44
    %p46 = scmp.ne.s32.totalorder %s35, %s36
    %p47 = scmp.eq.s32.totalorder %s15, 0
    %p48 = por %p46, %p47
    %p49 = scmp.ne.s32.totalorder %s35, %s36
    %p50 = scmp.eq.s32.totalorder %s16, 2
    %p51 = por %p49, %p50
    %p53 = scmp.ne.s32.totalorder %s36, %s52
    %p54 = scmp.eq.s32.totalorder %s16, 0
    %p55 = por %p53, %p54
    %s57 = sadd.s32 %s56, 1
    %p60 = scmp.eq.s32.totalorder %s10, 2
    %p61 = scmp.ne.s32.totalorder %s56, %s58
    %p62 = scmp.eq.s32.totalorder %s10, 0
    %p63 = por %p61, %p62
    %p64 = scmp.ne.s32.totalorder %s56, %s58
    %p65 = scmp.eq.s32.totalorder %s15, 2
    %p66 = por %p64, %p65
    %p67 = scmp.ne.s32.totalorder %s58, %s59
    %p68 = scmp.eq.s32.totalorder %s15, 0
    %p69 = por %p67, %p68
    %p70 = scmp.ne.s32.totalorder %s58, %s59
    %p71 = scmp.eq.s32.totalorder %s16, 2
    %p72 = por %p70, %p71
    %p74 = scmp.ne.s32.totalorder %s59, %s73
    %p75 = scmp.eq.s32.totalorder %s16, 0
    %p76 = por %p74, %p75
    %s77 = ssub.s32 %s17, %s29
    %p78 = scmp.eq.s32.totalorder %s77, 0
    %s80 = sadd.s32 %s79, 1
    %s81 = scalar_select %p78, %s79, %s80
    %p84 = pneg %p78
    %p85 = scmp.eq.s32.totalorder %s10, 2
    %p86 = por %p84, %p85
    %p87 = scmp.ne.s32.totalorder %s79, %s82
    %p88 = scmp.eq.s32.totalorder %s10, 0
    %p89 = por %p87, %p88
    %p90 = scmp.ne.s32.totalorder %s79, %s82
    %p91 = scmp.eq.s32.totalorder %s15, 2
    %p92 = por %p90, %p91
    %p93 = scmp.ne.s32.totalorder %s82, %s83
    %p94 = scmp.eq.s32.totalorder %s15, 0
    %p95 = por %p93, %p94
    %p96 = scmp.ne.s32.totalorder %s82, %s83
    %p97 = scmp.eq.s32.totalorder %s16, 2
    %p98 = por %p96, %p97
    %p100 = scmp.ne.s32.totalorder %s83, %s99
    %p101 = scmp.eq.s32.totalorder %s16, 0
    %p102 = por %p100, %p101
    %s103 = ssub.s32 %s17, %s29
    %p104 = scmp.eq.s32.totalorder %s103, 0
    %s106 = sadd.s32 %s105, 1
    %s107 = scalar_select %p104, %s105, %s106
    %p110 = pneg %p104
    %p111 = scmp.eq.s32.totalorder %s10, 2
    %p112 = por %p110, %p111
    %p113 = scmp.ne.s32.totalorder %s105, %s108
    %p114 = scmp.eq.s32.totalorder %s10, 0
    %p115 = por %p113, %p114
    %p116 = scmp.ne.s32.totalorder %s105, %s108
    %p117 = scmp.eq.s32.totalorder %s15, 2
    %p118 = por %p116, %p117
    %p119 = scmp.ne.s32.totalorder %s108, %s109
    %p120 = scmp.eq.s32.totalorder %s15, 0
    %p121 = por %p119, %p120
    %p122 = scmp.ne.s32.totalorder %s108, %s109
    %p123 = scmp.eq.s32.totalorder %s16, 2
    %p124 = por %p122, %p123
    %p126 = scmp.ne.s32.totalorder %s109, %s125
    %p127 = scmp.eq.s32.totalorder %s16, 0
    %p128 = por %p126, %p127
    %s129 = ssub.s32 %s18, %s25
    %p130 = scmp.eq.s32.totalorder %s129, 0
    %s132 = sadd.s32 %s131, 1
    %s133 = scalar_select %p130, %s131, %s132
    %p136 = pneg %p130
    %p137 = scmp.eq.s32.totalorder %s10, 2
    %p138 = por %p136, %p137
    %p139 = scmp.ne.s32.totalorder %s131, %s134
    %p140 = scmp.eq.s32.totalorder %s10, 0
    %p141 = por %p139, %p140
    %p142 = scmp.ne.s32.totalorder %s131, %s134
    %p143 = scmp.eq.s32.totalorder %s15, 2
    %p144 = por %p142, %p143
    %p145 = scmp.ne.s32.totalorder %s134, %s135
    %p146 = scmp.eq.s32.totalorder %s15, 0
    %p147 = por %p145, %p146
    %p148 = scmp.ne.s32.totalorder %s134, %s135
    %p149 = scmp.eq.s32.totalorder %s16, 2
    %p150 = por %p148, %p149
    %p152 = scmp.ne.s32.totalorder %s135, %s151
    %p153 = scmp.eq.s32.totalorder %s16, 0
    %p154 = por %p152, %p153
    %p155 = scmp.le.s32.totalorder 1, %s10
    %p156 = scmp.lt.s32.totalorder %s10, 4
    %p157 = pnand %p155, %p156
    %p158 = pneg %p157
    // Predicated region
    $region9: #{gcn_forward.1} parent=5 // pred_check
      _
    $region10: #{gcn_forward.1} parent=5 // pred_check_branch
      %160 = sbr.rel (%p157) target = $region12
    $region11: #{gcn_forward.1} parent=5 // pred_region
      %s161 = ssub.s32 %s10, 1
      // Predicated region
      $region13: #{gcn_forward.1} parent=11 // pred_check
        %p162 = pneg %p48
      $region14: #{gcn_forward.1} parent=11 // pred_check_branch
        %164 = sbr.rel (%p162) target = $region16
      $region15: #{gcn_forward.1} parent=11 // pred_region
        %s165 = smul.u32 16, %s20
        %p166 = scmp.lt.s32.totalorder %s165, 15
        %s167 = scalar_select %p166, %s165, 15
        %s168 = smul.addr %s167, 4
        %s169 = scalar_lea.vmem %s0, %s168
        %s170 = smul.u32 16, %s20
      $region16: #{gcn_forward.1} parent=11 // pred_fallthru
        _
      // Predicated region
      $region17: #{gcn_forward.1} parent=11 // pred_check
        %p171 = pneg %p69
      $region18: #{gcn_forward.1} parent=11 // pred_check_branch
        %173 = sbr.rel (%p171) target = $region20
      $region19: #{gcn_forward.1} parent=11 // pred_region
        _
      $region20: #{gcn_forward.1} parent=11 // pred_fallthru
        _
    $region12: #{gcn_forward.1} parent=5 // pred_fallthru
      _
    %p174 = scmp.lt.s32.totalorder %s10, 3
    // Predicated region
    $region21: #{gcn_forward.1} parent=5 // pred_check
      %p175 = pneg %p174
    $region22: #{gcn_forward.1} parent=5 // pred_check_branch
      %177 = sbr.rel (%p175) target = $region24
    $region23: #{gcn_forward.1} parent=5 // pred_region
      // Predicated region
      $region25: #{gcn_forward.1} parent=23 // pred_check
        %p178 = pneg %p89
      $region26: #{gcn_forward.1} parent=23 // pred_check_branch
        %180 = sbr.rel (%p178) target = $region28
      $region27: #{gcn_forward.1} parent=23 // pred_region
        %p181 = scmp.lt.s32.totalorder %s17, 2
        %s182 = scalar_select %p181, %s17, 2
        %s183 = smul.addr %s182, 16
        %s184 = smul.addr %s183, 8
        %s185 = scalar_lea.vmem %s2, %s184
      $region28: #{gcn_forward.1} parent=23 // pred_fallthru
        _
      // Predicated region
      $region29: #{gcn_forward.1} parent=23 // pred_check
        %p186 = pneg %p115
      $region30: #{gcn_forward.1} parent=23 // pred_check_branch
        %188 = sbr.rel (%p186) target = $region32
      $region31: #{gcn_forward.1} parent=23 // pred_region
        %p189 = scmp.lt.s32.totalorder %s17, 2
        %s190 = scalar_select %p189, %s17, 2
        %s191 = scalar_lea.vmem %s3, %s190
      $region32: #{gcn_forward.1} parent=23 // pred_fallthru
        _
    $region24: #{gcn_forward.1} parent=5 // pred_fallthru
      _
    %p192 = scmp.le.s32.totalorder 1, %s10
    %p193 = scmp.lt.s32.totalorder %s10, 4
    %p194 = pnand %p192, %p193
    %p195 = pneg %p194
    // Predicated region
    $region33: #{gcn_forward.1} parent=5 // pred_check
      _
    $region34: #{gcn_forward.1} parent=5 // pred_check_branch
      %197 = sbr.rel (%p194) target = $region36
    $region35: #{gcn_forward.1} parent=5 // pred_region
      %s198 = ssub.s32 %s10, 1
      %s199 = smul.u32 16, %s20
      %p200 = scmp.lt.s32.totalorder %s199, 15
      %s201 = scalar_select %p200, %s199, 15
      %s202 = smul.addr %s201, 4
      %s203 = scalar_lea.vmem %s0, %s202
      %p204 = pneg %p48
      %p205 = pneg %p45
      %p206 = pneg %p69
      %p207 = pneg %p66
      %p208 = scmp.lt.s32.totalorder %s19, 2
      %s209 = scalar_select %p208, %s19, 2
      %s210 = smul.addr %s209, 16
      %s211 = smul.addr %s210, 8
      %s212 = scalar_lea.vmem %s2, %s211
      %p213 = pneg %p95
      %p214 = pneg %p92
      %p215 = scmp.lt.s32.totalorder %s19, 2
      %s216 = scalar_select %p215, %s19, 2
      %s217 = scalar_lea.vmem %s3, %s216
      %p218 = pneg %p121
      %p219 = pneg %p118
      %p220 = pneg %p147
      %p221 = pneg %p144
      %s222 = smul.u32 16, %s20
      %p223 = scmp.lt.s32.totalorder %s222, 15
      %s224 = scalar_select %p223, %s222, 15
      %s225 = smul.addr %s224, 8
      %s226 = scalar_lea.vmem %s4, %s225
      %s227 = smul.u32 16, %s20
      %p228 = scmp.lt.s32.totalorder %s227, 15
      %s229 = scalar_select %p228, %s227, 15
      %s230 = smul.addr %s229, 4
      %s231 = scalar_lea.vmem %s0, %s230
      %s232 = smul.u32 16, %s20
      %p233 = scmp.lt.s32.totalorder %s19, 2
      %s234 = scalar_select %p233, %s19, 2
      %s235 = smul.addr %s234, 16
      %s236 = smul.addr %s235, 8
      %s237 = scalar_lea.vmem %s2, %s236
      %p238 = scmp.lt.s32.totalorder %s19, 2
      %s239 = scalar_select %p238, %s19, 2
      %s240 = scalar_lea.vmem %s3, %s239
      %s241 = smul.u32 16, %s20
      %p242 = scmp.lt.s32.totalorder %s241, 15
      %s243 = scalar_select %p242, %s241, 15
      %s244 = smul.addr %s243, 8
      %s245 = scalar_lea.vmem %s4, %s244
      %s246 = smul.u32 16, %s20
      %v247 = vld [vmem:[%s237] sm:$0xff]
      %v248 = vld [vmem:[%s237 + $0x8] sm:$0xff]
      %v249 = vld [vmem:[%s237 + $0x10] sm:$0xff]
      %v250 = vld [vmem:[%s237 + $0x18] sm:$0xff]
      %v251 = vld [vmem:[%s237 + $0x20] sm:$0xff]
      %v252 = vld [vmem:[%s237 + $0x28] sm:$0xff]
      %v253 = vld [vmem:[%s237 + $0x30] sm:$0xff]
      %v254 = vld [vmem:[%s237 + $0x38] sm:$0xff]
      %v255 = vld [vmem:[%s237 + $0x40] sm:$0xff]
      %v256 = vld [vmem:[%s237 + $0x48] sm:$0xff]
      %v257 = vld [vmem:[%s237 + $0x50] sm:$0xff]
      %v258 = vld [vmem:[%s237 + $0x58] sm:$0xff]
      %v259 = vld [vmem:[%s237 + $0x60] sm:$0xff]
      %v260 = vld [vmem:[%s237 + $0x68] sm:$0xff]
      %v261 = vld [vmem:[%s237 + $0x70] sm:$0xff]
      %v262 = vld [vmem:[%s237 + $0x78] sm:$0xff]
      %v263 = vld [vmem:[%s240] sm:$0x1]
      %p264 = scmp.eq.s32.totalorder %s20, 0
      // Predicated region
      $region37: #{gcn_forward.1} parent=35 // pred_check
        %p265 = pneg %p264
      $region38: #{gcn_forward.1} parent=35 // pred_check_branch
        %267 = sbr.rel (%p265) target = $region40
      $region39: #{gcn_forward.1} parent=35 // pred_region
        %p268 = scmp.eq.s32.totalorder %s19, 0
        // Predicated region
        $region41: #{gcn_forward.1} parent=39 // pred_check
          %p269 = pneg %p268
        $region42: #{gcn_forward.1} parent=39 // pred_check_branch
          %271 = sbr.rel (%p269) target = $region44
        $region43: #{gcn_forward.1} parent=39 // pred_region
          %v272 = vld [vmem:[%s1] sm:$0xff]
          %v273 = vld [vmem:[%s1 + $0x8] sm:$0xff]
          %v274 = vld [vmem:[%s1 + $0x10] sm:$0xff]
          %v275 = vld [vmem:[%s1 + $0x18] sm:$0xff]
          %v276 = vld [vmem:[%s1 + $0x20] sm:$0xff]
          %v277 = vld [vmem:[%s1 + $0x28] sm:$0xff]
          %v278 = vld [vmem:[%s1 + $0x30] sm:$0xff]
          %v279 = vld [vmem:[%s1 + $0x38] sm:$0xff]
          %v280 = vld [vmem:[%s1 + $0x40] sm:$0xff]
          %v281 = vld [vmem:[%s1 + $0x48] sm:$0xff]
          %v282 = vld [vmem:[%s1 + $0x50] sm:$0xff]
          %v283 = vld [vmem:[%s1 + $0x58] sm:$0xff]
          %v284 = vld [vmem:[%s1 + $0x60] sm:$0xff]
          %v285 = vld [vmem:[%s1 + $0x68] sm:$0xff]
          %v286 = vld [vmem:[%s1 + $0x70] sm:$0xff]
          %v287 = vld [vmem:[%s1 + $0x78] sm:$0xff]
          %288 = vmatpush.msra.mxu0 %v262
          %289 = vmatpush.msra.mxu0 %v261
          %290 = vmatpush.msra.mxu0 %v260
          %291 = vmatpush.msra.mxu0 %v259
          %292 = vmatpush.msra.mxu0 %v258
          %293 = vmatpush.msra.mxu0 %v257
          %294 = vmatpush.msra.mxu0 %v256
          %295 = vmatpush.msra.mxu0 %v255
          %296 = vmatpush.msra.mxu0 %v254
          %297 = vmatpush.msra.mxu0 %v253
          %298 = vmatpush.msra.mxu0 %v252
          %299 = vmatpush.msra.mxu0 %v251
          %300 = vmatpush.msra.mxu0 %v250
          %301 = vmatpush.msra.mxu0 %v249
          %302 = vmatpush.msra.mxu0 %v248
          %303 = vmatpush.msra.mxu0 %v247
          %304 = vmatmul.f32.gmra.mxu0 %v272
          %v305 = vpop.f32.mrf.mxu0
          %v306 = vadd.f32 0.0, %v305
          %307 = vmatmul.f32.gmra.mxu0 %v273
          %v308 = vpop.f32.mrf.mxu0
          %v309 = vadd.f32 0.0, %v308
          %310 = vmatmul.f32.gmra.mxu0 %v274
          %v311 = vpop.f32.mrf.mxu0
          %v312 = vadd.f32 0.0, %v311
          %313 = vmatmul.f32.gmra.mxu0 %v275
          %v314 = vpop.f32.mrf.mxu0
          %v315 = vadd.f32 0.0, %v314
          %316 = vmatmul.f32.gmra.mxu0 %v276
          %v317 = vpop.f32.mrf.mxu0
          %v318 = vadd.f32 0.0, %v317
          %319 = vmatmul.f32.gmra.mxu0 %v277
          %v320 = vpop.f32.mrf.mxu0
          %v321 = vadd.f32 0.0, %v320
          %322 = vmatmul.f32.gmra.mxu0 %v278
          %v323 = vpop.f32.mrf.mxu0
          %v324 = vadd.f32 0.0, %v323
          %325 = vmatmul.f32.gmra.mxu0 %v279
          %v326 = vpop.f32.mrf.mxu0
          %v327 = vadd.f32 0.0, %v326
          %328 = vmatmul.f32.gmra.mxu0 %v280
          %v329 = vpop.f32.mrf.mxu0
          %v330 = vadd.f32 0.0, %v329
          %331 = vmatmul.f32.gmra.mxu0 %v281
          %v332 = vpop.f32.mrf.mxu0
          %v333 = vadd.f32 0.0, %v332
          %334 = vmatmul.f32.gmra.mxu0 %v282
          %v335 = vpop.f32.mrf.mxu0
          %v336 = vadd.f32 0.0, %v335
          %337 = vmatmul.f32.gmra.mxu0 %v283
          %v338 = vpop.f32.mrf.mxu0
          %v339 = vadd.f32 0.0, %v338
          %340 = vmatmul.f32.gmra.mxu0 %v284
          %v341 = vpop.f32.mrf.mxu0
          %v342 = vadd.f32 0.0, %v341
          %343 = vmatmul.f32.gmra.mxu0 %v285
          %v344 = vpop.f32.mrf.mxu0
          %v345 = vadd.f32 0.0, %v344
          %346 = vmatmul.f32.gmra.mxu0 %v286
          %v347 = vpop.f32.mrf.mxu0
          %v348 = vadd.f32 0.0, %v347
          %349 = vmatmul.f32.gmra.mxu0 %v287
          %v350 = vpop.f32.mrf.mxu0
          %v351 = vadd.f32 0.0, %v350
          %352 = vdwg.mxu0
          %v353 = vpack.c.bf16 %v306, %v306
          %v354 = vpack.c.bf16 %v309, %v309
          %v355 = vpack.c.bf16 %v312, %v312
          %v356 = vpack.c.bf16 %v315, %v315
          %v357 = vpack.c.bf16 %v318, %v318
          %v358 = vpack.c.bf16 %v321, %v321
          %v359 = vpack.c.bf16 %v324, %v324
          %v360 = vpack.c.bf16 %v327, %v327
          %v361 = vpack.c.bf16 %v330, %v330
          %v362 = vpack.c.bf16 %v333, %v333
          %v363 = vpack.c.bf16 %v336, %v336
          %v364 = vpack.c.bf16 %v339, %v339
          %v365 = vpack.c.bf16 %v342, %v342
          %v366 = vpack.c.bf16 %v345, %v345
          %v367 = vpack.c.bf16 %v348, %v348
          %v368 = vpack.c.bf16 %v351, %v351
          %369 = vst [vmem:[#allocation3] sm:$0xf] %v353
          %370 = vst [vmem:[#allocation3 + $0x4] sm:$0xf] %v354
          %371 = vst [vmem:[#allocation3 + $0x8] sm:$0xf] %v355
          %372 = vst [vmem:[#allocation3 + $0xc] sm:$0xf] %v356
          %373 = vst [vmem:[#allocation3 + $0x10] sm:$0xf] %v357
          %374 = vst [vmem:[#allocation3 + $0x14] sm:$0xf] %v358
          %375 = vst [vmem:[#allocation3 + $0x18] sm:$0xf] %v359
          %376 = vst [vmem:[#allocation3 + $0x1c] sm:$0xf] %v360
          %377 = vst [vmem:[#allocation3 + $0x20] sm:$0xf] %v361
          %378 = vst [vmem:[#allocation3 + $0x24] sm:$0xf] %v362
          %379 = vst [vmem:[#allocation3 + $0x28] sm:$0xf] %v363
          %380 = vst [vmem:[#allocation3 + $0x2c] sm:$0xf] %v364
          %381 = vst [vmem:[#allocation3 + $0x30] sm:$0xf] %v365
          %382 = vst [vmem:[#allocation3 + $0x34] sm:$0xf] %v366
          %383 = vst [vmem:[#allocation3 + $0x38] sm:$0xf] %v367
          %384 = vst [vmem:[#allocation3 + $0x3c] sm:$0xf] %v368
        $region44: #{gcn_forward.1} parent=39 // pred_fallthru
          _
        %p385 = scmp.gt.s32.totalorder %s19, 0
        // Predicated region
        $region45: #{gcn_forward.1} parent=39 // pred_check
          %p386 = pneg %p385
        $region46: #{gcn_forward.1} parent=39 // pred_check_branch
          %388 = sbr.rel (%p386) target = $region48
        $region47: #{gcn_forward.1} parent=39 // pred_region
          %v389 = vld [vmem:[#allocation2] sm:$0xff]
          %v390 = vld [vmem:[#allocation2 + $0x8] sm:$0xff]
          %v391 = vld [vmem:[#allocation2 + $0x10] sm:$0xff]
          %v392 = vld [vmem:[#allocation2 + $0x18] sm:$0xff]
          %v393 = vld [vmem:[#allocation2 + $0x20] sm:$0xff]
          %v394 = vld [vmem:[#allocation2 + $0x28] sm:$0xff]
          %v395 = vld [vmem:[#allocation2 + $0x30] sm:$0xff]
          %v396 = vld [vmem:[#allocation2 + $0x38] sm:$0xff]
          %v397 = vld [vmem:[#allocation2 + $0x40] sm:$0xff]
          %v398 = vld [vmem:[#allocation2 + $0x48] sm:$0xff]
          %v399 = vld [vmem:[#allocation2 + $0x50] sm:$0xff]
          %v400 = vld [vmem:[#allocation2 + $0x58] sm:$0xff]
          %v401 = vld [vmem:[#allocation2 + $0x60] sm:$0xff]
          %v402 = vld [vmem:[#allocation2 + $0x68] sm:$0xff]
          %v403 = vld [vmem:[#allocation2 + $0x70] sm:$0xff]
          %v404 = vld [vmem:[#allocation2 + $0x78] sm:$0xff]
          %405 = vmatpush.msra.mxu0 %v262
          %406 = vmatpush.msra.mxu0 %v261
          %407 = vmatpush.msra.mxu0 %v260
          %408 = vmatpush.msra.mxu0 %v259
          %409 = vmatpush.msra.mxu0 %v258
          %410 = vmatpush.msra.mxu0 %v257
          %411 = vmatpush.msra.mxu0 %v256
          %412 = vmatpush.msra.mxu0 %v255
          %413 = vmatpush.msra.mxu0 %v254
          %414 = vmatpush.msra.mxu0 %v253
          %415 = vmatpush.msra.mxu0 %v252
          %416 = vmatpush.msra.mxu0 %v251
          %417 = vmatpush.msra.mxu0 %v250
          %418 = vmatpush.msra.mxu0 %v249
          %419 = vmatpush.msra.mxu0 %v248
          %420 = vmatpush.msra.mxu0 %v247
          %421 = vmatmul.f32.gmra.mxu0 %v389
          %v422 = vpop.f32.mrf.mxu0
          %v423 = vadd.f32 0.0, %v422
          %424 = vmatmul.f32.gmra.mxu0 %v390
          %v425 = vpop.f32.mrf.mxu0
          %v426 = vadd.f32 0.0, %v425
          %427 = vmatmul.f32.gmra.mxu0 %v391
          %v428 = vpop.f32.mrf.mxu0
          %v429 = vadd.f32 0.0, %v428
          %430 = vmatmul.f32.gmra.mxu0 %v392
          %v431 = vpop.f32.mrf.mxu0
          %v432 = vadd.f32 0.0, %v431
          %433 = vmatmul.f32.gmra.mxu0 %v393
          %v434 = vpop.f32.mrf.mxu0
          %v435 = vadd.f32 0.0, %v434
          %436 = vmatmul.f32.gmra.mxu0 %v394
          %v437 = vpop.f32.mrf.mxu0
          %v438 = vadd.f32 0.0, %v437
          %439 = vmatmul.f32.gmra.mxu0 %v395
          %v440 = vpop.f32.mrf.mxu0
          %v441 = vadd.f32 0.0, %v440
          %442 = vmatmul.f32.gmra.mxu0 %v396
          %v443 = vpop.f32.mrf.mxu0
          %v444 = vadd.f32 0.0, %v443
          %445 = vmatmul.f32.gmra.mxu0 %v397
          %v446 = vpop.f32.mrf.mxu0
          %v447 = vadd.f32 0.0, %v446
          %448 = vmatmul.f32.gmra.mxu0 %v398
          %v449 = vpop.f32.mrf.mxu0
          %v450 = vadd.f32 0.0, %v449
          %451 = vmatmul.f32.gmra.mxu0 %v399
          %v452 = vpop.f32.mrf.mxu0
          %v453 = vadd.f32 0.0, %v452
          %454 = vmatmul.f32.gmra.mxu0 %v400
          %v455 = vpop.f32.mrf.mxu0
          %v456 = vadd.f32 0.0, %v455
          %457 = vmatmul.f32.gmra.mxu0 %v401
          %v458 = vpop.f32.mrf.mxu0
          %v459 = vadd.f32 0.0, %v458
          %460 = vmatmul.f32.gmra.mxu0 %v402
          %v461 = vpop.f32.mrf.mxu0
          %v462 = vadd.f32 0.0, %v461
          %463 = vmatmul.f32.gmra.mxu0 %v403
          %v464 = vpop.f32.mrf.mxu0
          %v465 = vadd.f32 0.0, %v464
          %466 = vmatmul.f32.gmra.mxu0 %v404
          %v467 = vpop.f32.mrf.mxu0
          %v468 = vadd.f32 0.0, %v467
          %469 = vdwg.mxu0
          %v470 = vpack.c.bf16 %v423, %v423
          %v471 = vpack.c.bf16 %v426, %v426
          %v472 = vpack.c.bf16 %v429, %v429
          %v473 = vpack.c.bf16 %v432, %v432
          %v474 = vpack.c.bf16 %v435, %v435
          %v475 = vpack.c.bf16 %v438, %v438
          %v476 = vpack.c.bf16 %v441, %v441
          %v477 = vpack.c.bf16 %v444, %v444
          %v478 = vpack.c.bf16 %v447, %v447
          %v479 = vpack.c.bf16 %v450, %v450
          %v480 = vpack.c.bf16 %v453, %v453
          %v481 = vpack.c.bf16 %v456, %v456
          %v482 = vpack.c.bf16 %v459, %v459
          %v483 = vpack.c.bf16 %v462, %v462
          %v484 = vpack.c.bf16 %v465, %v465
          %v485 = vpack.c.bf16 %v468, %v468
          %486 = vst [vmem:[#allocation3] sm:$0xf] %v470
          %487 = vst [vmem:[#allocation3 + $0x4] sm:$0xf] %v471
          %488 = vst [vmem:[#allocation3 + $0x8] sm:$0xf] %v472
          %489 = vst [vmem:[#allocation3 + $0xc] sm:$0xf] %v473
          %490 = vst [vmem:[#allocation3 + $0x10] sm:$0xf] %v474
          %491 = vst [vmem:[#allocation3 + $0x14] sm:$0xf] %v475
          %492 = vst [vmem:[#allocation3 + $0x18] sm:$0xf] %v476
          %493 = vst [vmem:[#allocation3 + $0x1c] sm:$0xf] %v477
          %494 = vst [vmem:[#allocation3 + $0x20] sm:$0xf] %v478
          %495 = vst [vmem:[#allocation3 + $0x24] sm:$0xf] %v479
          %496 = vst [vmem:[#allocation3 + $0x28] sm:$0xf] %v480
          %497 = vst [vmem:[#allocation3 + $0x2c] sm:$0xf] %v481
          %498 = vst [vmem:[#allocation3 + $0x30] sm:$0xf] %v482
          %499 = vst [vmem:[#allocation3 + $0x34] sm:$0xf] %v483
          %500 = vst [vmem:[#allocation3 + $0x38] sm:$0xf] %v484
          %501 = vst [vmem:[#allocation3 + $0x3c] sm:$0xf] %v485
        $region48: #{gcn_forward.1} parent=39 // pred_fallthru
          _
      $region40: #{gcn_forward.1} parent=35 // pred_fallthru
        _
      %v502 = vld [vmem:[%s231] sm:$0xf]
      %v503 = vld [vmem:[%s231 + $0x4] sm:$0xf]
      %v504 = vld [vmem:[%s231 + $0x8] sm:$0xf]
      %v505 = vld [vmem:[%s231 + $0xc] sm:$0xf]
      %v506 = vld [vmem:[%s231 + $0x10] sm:$0xf]
      %v507 = vld [vmem:[%s231 + $0x14] sm:$0xf]
      %v508 = vld [vmem:[%s231 + $0x18] sm:$0xf]
      %v509 = vld [vmem:[%s231 + $0x1c] sm:$0xf]
      %v510 = vld [vmem:[%s231 + $0x20] sm:$0xf]
      %v511 = vld [vmem:[%s231 + $0x24] sm:$0xf]
      %v512 = vld [vmem:[%s231 + $0x28] sm:$0xf]
      %v513 = vld [vmem:[%s231 + $0x2c] sm:$0xf]
      %v514 = vld [vmem:[%s231 + $0x30] sm:$0xf]
      %v515 = vld [vmem:[%s231 + $0x34] sm:$0xf]
      %v516 = vld [vmem:[%s231 + $0x38] sm:$0xf]
      %v517 = vld [vmem:[%s231 + $0x3c] sm:$0xf]
      %v518 = vld [vmem:[#allocation3] sm:$0xf]
      %v519 = vld [vmem:[#allocation3 + $0x4] sm:$0xf]
      %v520 = vld [vmem:[#allocation3 + $0x8] sm:$0xf]
      %v521 = vld [vmem:[#allocation3 + $0xc] sm:$0xf]
      %v522 = vld [vmem:[#allocation3 + $0x10] sm:$0xf]
      %v523 = vld [vmem:[#allocation3 + $0x14] sm:$0xf]
      %v524 = vld [vmem:[#allocation3 + $0x18] sm:$0xf]
      %v525 = vld [vmem:[#allocation3 + $0x1c] sm:$0xf]
      %v526 = vld [vmem:[#allocation3 + $0x20] sm:$0xf]
      %v527 = vld [vmem:[#allocation3 + $0x24] sm:$0xf]
      %v528 = vld [vmem:[#allocation3 + $0x28] sm:$0xf]
      %v529 = vld [vmem:[#allocation3 + $0x2c] sm:$0xf]
      %v530 = vld [vmem:[#allocation3 + $0x30] sm:$0xf]
      %v531 = vld [vmem:[#allocation3 + $0x34] sm:$0xf]
      %v532 = vld [vmem:[#allocation3 + $0x38] sm:$0xf]
      %v533 = vld [vmem:[#allocation3 + $0x3c] sm:$0xf]
      %v535 = vperm.slane %v263, 0
      %v553 = vunpack.c.l.b16 %v502
      %v554 = vunpack.c.l.b16 %v503
      %v555 = vunpack.c.l.b16 %v504
      %v556 = vunpack.c.l.b16 %v505
      %v557 = vunpack.c.l.b16 %v506
      %v558 = vunpack.c.l.b16 %v507
      %v559 = vunpack.c.l.b16 %v508
      %v560 = vunpack.c.l.b16 %v509
      %v561 = vunpack.c.l.b16 %v510
      %v562 = vunpack.c.l.b16 %v511
      %v563 = vunpack.c.l.b16 %v512
      %v564 = vunpack.c.l.b16 %v513
      %v565 = vunpack.c.l.b16 %v514
      %v566 = vunpack.c.l.b16 %v515
      %v567 = vunpack.c.l.b16 %v516
      %v568 = vunpack.c.l.b16 %v517
      %v569 = vpack.c.b16 %v554, %v553
      %v570 = vpack.c.b16 %v556, %v555
      %v571 = vpack.c.b16 %v558, %v557
      %v572 = vpack.c.b16 %v560, %v559
      %v573 = vpack.c.b16 %v562, %v561
      %v574 = vpack.c.b16 %v564, %v563
      %v575 = vpack.c.b16 %v566, %v565
      %v576 = vpack.c.b16 %v568, %v567
      %v601 = vunpack.c.l.b16 %v518
      %v602 = vunpack.c.l.b16 %v519
      %v603 = vunpack.c.l.b16 %v520
      %v604 = vunpack.c.l.b16 %v521
      %v605 = vunpack.c.l.b16 %v522
      %v606 = vunpack.c.l.b16 %v523
      %v607 = vunpack.c.l.b16 %v524
      %v608 = vunpack.c.l.b16 %v525
      %v609 = vunpack.c.l.b16 %v526
      %v610 = vunpack.c.l.b16 %v527
      %v611 = vunpack.c.l.b16 %v528
      %v612 = vunpack.c.l.b16 %v529
      %v613 = vunpack.c.l.b16 %v530
      %v614 = vunpack.c.l.b16 %v531
      %v615 = vunpack.c.l.b16 %v532
      %v616 = vunpack.c.l.b16 %v533
      %v617 = vpack.c.b16 %v602, %v601
      %v618 = vpack.c.b16 %v604, %v603
      %v619 = vpack.c.b16 %v606, %v605
      %v620 = vpack.c.b16 %v608, %v607
      %v621 = vpack.c.b16 %v610, %v609
      %v622 = vpack.c.b16 %v612, %v611
      %v623 = vpack.c.b16 %v614, %v613
      %v624 = vpack.c.b16 %v616, %v615
      %633 = vmatpush.bf16.msra.mxu0 %v624
      %634 = vmatpush.bf16.msra.mxu0 %v623
      %635 = vmatpush.bf16.msra.mxu0 %v622
      %636 = vmatpush.bf16.msra.mxu0 %v621
      %637 = vmatpush.bf16.msra.mxu0 %v620
      %638 = vmatpush.bf16.msra.mxu0 %v619
      %639 = vmatpush.bf16.msra.mxu0 %v618
      %640 = vmatpush.bf16.msra.mxu0 %v617
      %641 = vmatmul.bf16.gmra.mxu0 %v569
      %v642 = vpop.f32.mrf.mxu0
      %v643 = vadd.f32 %v535, %v642
      %v644 = vpop.f32.mrf.mxu0
      %v645 = vadd.f32 %v535, %v644
      %646 = vmatmul.bf16.gmra.mxu0 %v570
      %v647 = vpop.f32.mrf.mxu0
      %v648 = vadd.f32 %v535, %v647
      %v649 = vpop.f32.mrf.mxu0
      %v650 = vadd.f32 %v535, %v649
      %651 = vmatmul.bf16.gmra.mxu0 %v571
      %v652 = vpop.f32.mrf.mxu0
      %v653 = vadd.f32 %v535, %v652
      %v654 = vpop.f32.mrf.mxu0
      %v655 = vadd.f32 %v535, %v654
      %656 = vmatmul.bf16.gmra.mxu0 %v572
      %v657 = vpop.f32.mrf.mxu0
      %v658 = vadd.f32 %v535, %v657
      %v659 = vpop.f32.mrf.mxu0
      %v660 = vadd.f32 %v535, %v659
      %661 = vmatmul.bf16.gmra.mxu0 %v573
      %v662 = vpop.f32.mrf.mxu0
      %v663 = vadd.f32 %v535, %v662
      %v664 = vpop.f32.mrf.mxu0
      %v665 = vadd.f32 %v535, %v664
      %666 = vmatmul.bf16.gmra.mxu0 %v574
      %v667 = vpop.f32.mrf.mxu0
      %v668 = vadd.f32 %v535, %v667
      %v669 = vpop.f32.mrf.mxu0
      %v670 = vadd.f32 %v535, %v669
      %671 = vmatmul.bf16.gmra.mxu0 %v575
      %v672 = vpop.f32.mrf.mxu0
      %v673 = vadd.f32 %v535, %v672
      %v674 = vpop.f32.mrf.mxu0
      %v675 = vadd.f32 %v535, %v674
      %676 = vmatmul.bf16.gmra.mxu0 %v576
      %v677 = vpop.f32.mrf.mxu0
      %v678 = vadd.f32 %v535, %v677
      %v679 = vpop.f32.mrf.mxu0
      %v680 = vadd.f32 %v535, %v679
      %681 = vdwg.mxu0
      %p682 = scmp.lt.s32.totalorder %s19, 2
      %v683 = vmax.f32 %v643, 0.0
      %v684 = vmax.f32 %v645, 0.0
      %v685 = vmax.f32 %v648, 0.0
      %v686 = vmax.f32 %v650, 0.0
      %v687 = vmax.f32 %v653, 0.0
      %v688 = vmax.f32 %v655, 0.0
      %v689 = vmax.f32 %v658, 0.0
      %v690 = vmax.f32 %v660, 0.0
      %v691 = vmax.f32 %v663, 0.0
      %v692 = vmax.f32 %v665, 0.0
      %v693 = vmax.f32 %v668, 0.0
      %v694 = vmax.f32 %v670, 0.0
      %v695 = vmax.f32 %v673, 0.0
      %v696 = vmax.f32 %v675, 0.0
      %v697 = vmax.f32 %v678, 0.0
      %v698 = vmax.f32 %v680, 0.0
      %s699 = scalar_select %p682, 1, 0
      %v700 = vstv %s699
      %vm701 = vcmp.eq.s32.totalorder %v700, 1
      %v702 = vsel %vm701, %v683, %v643
      %v703 = vsel %vm701, %v684, %v645
      %v704 = vsel %vm701, %v685, %v648
      %v705 = vsel %vm701, %v686, %v650
      %v706 = vsel %vm701, %v687, %v653
      %v707 = vsel %vm701, %v688, %v655
      %v708 = vsel %vm701, %v689, %v658
      %v709 = vsel %vm701, %v690, %v660
      %v710 = vsel %vm701, %v691, %v663
      %v711 = vsel %vm701, %v692, %v665
      %v712 = vsel %vm701, %v693, %v668
      %v713 = vsel %vm701, %v694, %v670
      %v714 = vsel %vm701, %v695, %v673
      %v715 = vsel %vm701, %v696, %v675
      %v716 = vsel %vm701, %v697, %v678
      %v717 = vsel %vm701, %v698, %v680
      // Predicated region
      $region49: #{gcn_forward.1} parent=35 // pred_check
        %p718 = pneg %p682
      $region50: #{gcn_forward.1} parent=35 // pred_check_branch
        %720 = sbr.rel (%p718) target = $region52
      $region51: #{gcn_forward.1} parent=35 // pred_region
        %s721 = smul.u32 %s20, 128
        %s722 = scalar_lea.vmem [#allocation2], %s721
        %723 = vst [vmem:[%s722] sm:$0xff] %v702
        %724 = vst [vmem:[%s722 + $0x8] sm:$0xff] %v703
        %725 = vst [vmem:[%s722 + $0x10] sm:$0xff] %v704
        %726 = vst [vmem:[%s722 + $0x18] sm:$0xff] %v705
        %727 = vst [vmem:[%s722 + $0x20] sm:$0xff] %v706
        %728 = vst [vmem:[%s722 + $0x28] sm:$0xff] %v707
        %729 = vst [vmem:[%s722 + $0x30] sm:$0xff] %v708
        %730 = vst [vmem:[%s722 + $0x38] sm:$0xff] %v709
        %731 = vst [vmem:[%s722 + $0x40] sm:$0xff] %v710
        %732 = vst [vmem:[%s722 + $0x48] sm:$0xff] %v711
        %733 = vst [vmem:[%s722 + $0x50] sm:$0xff] %v712
        %734 = vst [vmem:[%s722 + $0x58] sm:$0xff] %v713
        %735 = vst [vmem:[%s722 + $0x60] sm:$0xff] %v714
        %736 = vst [vmem:[%s722 + $0x68] sm:$0xff] %v715
        %737 = vst [vmem:[%s722 + $0x70] sm:$0xff] %v716
        %738 = vst [vmem:[%s722 + $0x78] sm:$0xff] %v717
      $region52: #{gcn_forward.1} parent=35 // pred_fallthru
        _
      %739 = vst [vmem:[%s245] sm:$0xff] %v702
      %740 = vst [vmem:[%s245 + $0x8] sm:$0xff] %v703
      %741 = vst [vmem:[%s245 + $0x10] sm:$0xff] %v704
      %742 = vst [vmem:[%s245 + $0x18] sm:$0xff] %v705
      %743 = vst [vmem:[%s245 + $0x20] sm:$0xff] %v706
      %744 = vst [vmem:[%s245 + $0x28] sm:$0xff] %v707
      %745 = vst [vmem:[%s245 + $0x30] sm:$0xff] %v708
      %746 = vst [vmem:[%s245 + $0x38] sm:$0xff] %v709
      %747 = vst [vmem:[%s245 + $0x40] sm:$0xff] %v710
      %748 = vst [vmem:[%s245 + $0x48] sm:$0xff] %v711
      %749 = vst [vmem:[%s245 + $0x50] sm:$0xff] %v712
      %750 = vst [vmem:[%s245 + $0x58] sm:$0xff] %v713
      %751 = vst [vmem:[%s245 + $0x60] sm:$0xff] %v714
      %752 = vst [vmem:[%s245 + $0x68] sm:$0xff] %v715
      %753 = vst [vmem:[%s245 + $0x70] sm:$0xff] %v716
      %754 = vst [vmem:[%s245 + $0x78] sm:$0xff] %v717
      %s755 = smul.u32 16, %s20
      %p756 = scmp.lt.s32.totalorder %s755, 15
      %s757 = scalar_select %p756, %s755, 15
      %s758 = smul.addr %s757, 8
      %s759 = scalar_lea.vmem %s4, %s758
      // Predicated region
      $region53: #{gcn_forward.1} parent=35 // pred_check
        %p760 = pneg %p144
      $region54: #{gcn_forward.1} parent=35 // pred_check_branch
        %762 = sbr.rel (%p760) target = $region56
      $region55: #{gcn_forward.1} parent=35 // pred_region
        %s763 = smul.u32 16, %s20
      $region56: #{gcn_forward.1} parent=35 // pred_fallthru
        _
      // Predicated region
      $region57: #{gcn_forward.1} parent=35 // pred_check
        %p764 = pneg %p144
      $region58: #{gcn_forward.1} parent=35 // pred_check_branch
        %766 = sbr.rel (%p764) target = $region60
      $region59: #{gcn_forward.1} parent=35 // pred_region
        %s767 = smul.u32 16, %s20
        %p768 = scmp.lt.s32.totalorder %s767, 15
        %s769 = scalar_select %p768, %s767, 15
        %s770 = smul.addr %s769, 8
        %s771 = scalar_lea.vmem %s4, %s770
      $region60: #{gcn_forward.1} parent=35 // pred_fallthru
        _
    $region36: #{gcn_forward.1} parent=5 // pred_fallthru
      _
    %p772 = scmp.le.s32.totalorder 2, %s10
    // Predicated region
    $region61: #{gcn_forward.1} parent=5 // pred_check
      %p773 = pneg %p772
    $region62: #{gcn_forward.1} parent=5 // pred_check_branch
      %775 = sbr.rel (%p773) target = $region64
    $region63: #{gcn_forward.1} parent=5 // pred_region
      %s776 = ssub.s32 %s10, 2
    $region64: #{gcn_forward.1} parent=5 // pred_fallthru
      _
  $region6: #{gcn_forward.1} parent=0 // loop_footer
    %s14 = sadd.s32 1, %s10
  $region7: #{gcn_forward.1} parent=0 // loop_footer_branch
    %9 = sbr.rel target = $region3
  $region8: #{gcn_forward.1} parent=0 // loop_exit
    _

</llo_original>
